<compile_context>
chip_gen: v7x
topology: tpu7x:2x2x1
jax: 0.10.0
libtpu: 0.0.40
codegen_flags: <defaults>
</compile_context>

<pallas_src>
import jax
import jax.numpy as jnp
from jax.experimental import pallas as pl
from jax.experimental.pallas import tpu as pltpu


def _round_up(x: int, m: int) -> int:
    return ((x + m - 1) // m) * m


def _tile_targets(itemsize: int) -> tuple:
    """(tn_target, tc_target) in elements, sized to the scoped-VMEM default."""
    try:
        kind = jax.devices()[0].device_kind.lower()
    except Exception:  # defensive: interpret mode / unusual runtimes
        kind = ""
    big_vmem = ("v6" in kind) or ("v7" in kind)        # 32 MiB scoped default
    budget = (16 << 20) if big_vmem else (8 << 20)     # ~half the scoped default
    tn = 1024
    tc = 1024 if big_vmem else 512
    # Double-buffered (x2) in + out (x2) tiles must fit the budget (covers wide
    # dtypes too; bf16/int8 only get cheaper).
    while 2 * 2 * tn * tc * itemsize > budget and tc > 128:
        tc //= 2
    while 2 * 2 * tn * tc * itemsize > budget and tn > 128:
        tn //= 2
    return tn, tc


def _pick_tile(dim: int, target: int) -> int:
    """Balanced, 128-aligned tile for one axis (full dim when it is small)."""
    if dim <= target:
        return dim  # block == full array dim satisfies the (8,128) rule exactly
    nblocks = pl.cdiv(dim, target)
    return min(_round_up(pl.cdiv(dim, nblocks), 128), target)


def _tile_transpose(x):
    """2-D on-chip transpose of a VMEM tile (lane-layout-aware when possible)."""
    einshape = getattr(pltpu, "einshape", None)
    if einshape is not None:
        try:
            return einshape("nc->cn", x)  # fewer XLU/relayout ops than swapaxes
        except Exception:
            pass
    return jnp.swapaxes(x, 0, 1)


def _transpose_kernel(x_ref, o_ref):
    # x_ref: (TN, TC) tile in VMEM -> o_ref: (TC, TN) tile (XLU transpose on-chip).
    o_ref[...] = _tile_transpose(x_ref[...])


def transpose_1_2(x: jax.Array) -> jax.Array:
    """Pallas equivalent of torch `x.transpose(1, 2).contiguous()` for 3-D x."""
    assert x.ndim == 3, "expected [B, N, C]"
    B, N, C = x.shape
    itemsize = jnp.dtype(x.dtype).itemsize

    # Skinny tensors: either the load (C) or the transposed store (N) lane dim
    # would be < 128 -> masked, lane-sparse vector memory ops.  Plain XLA
    # transpose is the better tool there.
    if min(N, C) < 128:
        return jnp.swapaxes(x, 1, 2)

    tn_target, tc_target = _tile_targets(itemsize)
    tn = _pick_tile(N, tn_target)
    tc = _pick_tile(C, tc_target)
    gn = pl.cdiv(N, tn)
    gc = pl.cdiv(C, tc)

    # Batch last; lead with the tile axis that has the most blocks so megacore
    # sharding on v7x splits real work instead of a tiny B axis.
    if gc > gn:
        grid = (gc, gn, B)
        in_map = lambda j, i, b: (b, i, j)
        out_map = lambda j, i, b: (b, j, i)
    else:
        grid = (gn, gc, B)
        in_map = lambda i, j, b: (b, i, j)
        out_map = lambda i, j, b: (b, j, i)

    return pl.pallas_call(
        _transpose_kernel,
        out_shape=jax.ShapeDtypeStruct((B, C, N), x.dtype),
        grid_spec=pltpu.PrefetchScalarGridSpec(
            num_scalar_prefetch=0,
            grid=grid,
            in_specs=[
                # batch dim squeezed out; (TN, TC) tile of the (N, C) slab
                pl.BlockSpec((pl.Squeezed(), tn, tc), in_map),
            ],
            # transposed tile lands at block (j, i) of the (C, N) output slab
            out_specs=pl.BlockSpec((pl.Squeezed(), tc, tn), out_map),
        ),
        compiler_params=pltpu.CompilerParams(
            # Pure data movement, no reduction: every grid point is independent.
            dimension_semantics=("parallel", "parallel", "parallel"),
        ),
        cost_estimate=pl.CostEstimate(
            flops=0,
            transcendentals=0,
            bytes_accessed=2 * B * N * C * itemsize,
        ),
    )(x)


if __name__ == "__main__":
    key = jax.random.PRNGKey(0)

    # Small but lane-dense shape [B, N, C] -> exercises the Pallas path.
    B, N, C = 2, 128, 256
    x = jax.random.normal(key, (B, N, C), dtype=jnp.float32)
    y = transpose_1_2(x)
    jax.block_until_ready(y)
    assert y.shape == (B, C, N) and y.dtype == x.dtype
    assert jnp.array_equal(y, jnp.transpose(x, (0, 2, 1))), "mismatch (dense)"

    # Ragged shape with one axis > tile target: balanced tiling + masked edges.
    x2 = jax.random.normal(jax.random.PRNGKey(0), (1, 1500, 520), dtype=jnp.float32)
    y2 = transpose_1_2(x2)
    jax.block_until_ready(y2)
    assert y2.shape == (1, 520, 1500)
    assert jnp.array_equal(y2, jnp.transpose(x2, (0, 2, 1))), "mismatch (ragged)"

    # Skinny shape: dispatches to the XLA fallback (lane-sparse stores avoided).
    x3 = jax.random.normal(jax.random.PRNGKey(0), (2, 8, 32), dtype=jnp.float32)
    y3 = transpose_1_2(x3)
    jax.block_until_ready(y3)
    assert jnp.array_equal(y3, jnp.transpose(x3, (0, 2, 1))), "mismatch (skinny)"

    # Packed-dtype path (bf16) through the Pallas kernel.
    x4 = jax.random.normal(jax.random.PRNGKey(0), (2, 256, 384), dtype=jnp.bfloat16)
    y4 = transpose_1_2(x4)
    jax.block_until_ready(y4)
    assert y4.dtype == jnp.bfloat16
    assert jnp.array_equal(y4, jnp.transpose(x4, (0, 2, 1))), "mismatch (bf16)"

    print("KERNEL_OK")
</pallas_src>

<mosaic_0001>
module attributes {stable_mosaic.version = 11 : i64} {
  func.func @_transpose_kernel(%arg0: i32, %arg1: i32, %arg2: i32, %arg3: memref<1x128x256xf32, #tpu.memory_space<vmem>>, %arg4: memref<1x256x128xf32, #tpu.memory_space<vmem>>) attributes {dimension_semantics = [#tpu.dimension_semantics<parallel>, #tpu.dimension_semantics<parallel>, #tpu.dimension_semantics<parallel>], iteration_bounds = array<i64: 1, 1, 2>, scalar_prefetch = 0 : i64, scratch_operands = 0 : i64, tpu.core_type = #tpu.core_type<tc>, window_params = [{transform_indices = @transform_0, window_bounds = array<i64: 1, 128, 256>}, {transform_indices = @transform_1, window_bounds = array<i64: 1, 256, 128>}]} {
    %c0 = arith.constant 0 : index
    %c0_0 = arith.constant 0 : index
    %c0_1 = arith.constant 0 : index
    %0 = vector.load %arg3[%c0, %c0_0, %c0_1] : memref<1x128x256xf32, #tpu.memory_space<vmem>>, vector<1x128x256xf32>
    %1 = vector.shape_cast %0 : vector<1x128x256xf32> to vector<128x256xf32>
    %2 = tpu.transpose %1, [1, 0] : vector<128x256xf32> -> vector<256x128xf32>
    %c0_2 = arith.constant 0 : index
    %c0_3 = arith.constant 0 : index
    %c0_4 = arith.constant 0 : index
    %3 = vector.load %arg4[%c0_2, %c0_3, %c0_4] : memref<1x256x128xf32, #tpu.memory_space<vmem>>, vector<1x256x128xf32>
    %4 = vector.shape_cast %3 : vector<1x256x128xf32> to vector<256x128xf32>
    %5 = vector.shape_cast %2 : vector<256x128xf32> to vector<1x256x128xf32>
    tpu.vector_store %arg4[%c0_2, %c0_3, %c0_4], %5 {strides = array<i32>} : memref<1x256x128xf32, #tpu.memory_space<vmem>>, vector<1x256x128xf32>,
    return
  }
  func.func @transform_0(%arg0: i32, %arg1: i32, %arg2: i32) -> (i32, i32, i32) {
    %c0_i32 = arith.constant 0 : i32
    return %arg2, %arg0, %arg1 : i32, i32, i32
  }
  func.func @transform_1(%arg0: i32, %arg1: i32, %arg2: i32) -> (i32, i32, i32) {
    %c0_i32 = arith.constant 0 : i32
    return %arg2, %arg1, %arg0 : i32, i32, i32
  }
}

</mosaic_0001>

<llo_original>
// kernel: tpu_custom_call.1
$region0: #{tpu_custom_call.1}
  #allocation0 [shape = 'u32[]', space=smem, size = 0x4, offset = 0x4, fixed_abs, tag = 'smem constant byte address 0x4 - core index']
  #allocation1 [shape = 'u32[144,128]{1,0:T(1,128)}', space=vmem, size = 0x12000, scoped, tag = 'internal scratch']
  %s0 = inlined_call_operand.hbm [shape: f32[2,128,256], index: 0, kind: input, shape index: {}]
  %s1 = inlined_call_operand.hbm [shape: f32[2,256,128], index: 1, kind: output, shape index: {}]
  %s2 = sld [smem:[#allocation0]]
  $region41: #{tpu_custom_call.1} parent=0
    _
  %s4 = ssub.s32 1, %s2
  %s5 = scalar_select 0, %s4, %s2
  $region1: #{tpu_custom_call.1} parent=0
    #allocation2 [shape = 'u8[262144]{0}', space=vmem, size = 0x40000, scoped, tag = 'input window, operand 0']
    #allocation3 [shape = 's32[2]{0}', space=sflag, size = 0x8, scoped, tag = 'scoped memory for tpu_custom_call.1']
    #allocation4 [shape = 's32[2]{0}', space=sflag, size = 0x8, scoped, tag = 'scoped memory for tpu_custom_call.1']
    #allocation5 [shape = 'u8[262144]{0}', space=vmem, size = 0x40000, scoped, tag = 'output window, operand 0']
    %6 = vsyncpa [#allocation3], 0
    %s7 = scalar_lea.sflag [#allocation3], 1
    %8 = vsyncpa %s7, 0
    %9 = vsyncpa [#allocation4], 0
    %s10 = scalar_lea.sflag [#allocation4], 1
    %11 = vsyncpa %s10, 0
    loop: start=0, step=1, limit=4
    $region2: #{tpu_custom_call.1} parent=1 // loop_pre_header
      _
    $region3: #{tpu_custom_call.1} parent=1 // loop_header
      %s13 = sphi 0, %s17
      %p14 = scmp.ge.s32.totalorder %s13, 4
      %s20 = sphi 0, %s39
      %s21 = sphi 0, %s35
      %s22 = sphi 0, %s31
      %s23 = sphi 0, %s20
      %s24 = sphi 0, %s21
      %s25 = sphi 0, %s22
      %s26 = sphi 0, %s23
      %s27 = sphi 0, %s24
      %s28 = sphi 0, %s25
      %s46 = sphi 0, %s48
      %s49 = sphi 0, %s46
      %s50 = sphi 0, %s49
      %s66 = sphi 0, %s50
      %s76 = sphi 0, %s78
      %s79 = sphi 0, %s76
      %s80 = sphi 0, %s79
      %s96 = sphi 0, %s80
    $region4: #{tpu_custom_call.1} parent=1 // loop_header_branch
      %16 = sbr.rel (%p14) target = $region8
    $region5: #{tpu_custom_call.1} parent=1 // loop_body
      %s18 = ssub.s32 %s13, 1
      %s19 = ssub.s32 %s13, 2
      %s29 = sadd.s32 1, %s22
      %p30 = scmp.ge.s32.totalorder %s29, 2
      %s31 = scalar_select %p30, 0, %s29
      %s32 = sadd.s32 1, %s21
      %s33 = scalar_select %p30, %s32, %s21
      %p34 = scmp.ge.s32.totalorder %s33, 1
      %s35 = scalar_select %p34, 0, %s33
      %s36 = sadd.s32 1, %s20
      %s37 = scalar_select %p34, %s36, %s20
      %p38 = scmp.ge.s32.totalorder %s37, 1
      %s39 = scalar_select %p38, 0, %s37
      %s40 = ssub.s32 %s22, %s31
      %s41 = ssub.s32 %s20, %s39
      %s42 = sor.u32 %s40, %s41
      %s43 = ssub.s32 %s21, %s35
      %s44 = sor.u32 %s42, %s43
      %p45 = scmp.eq.s32.totalorder %s44, 0
      %s47 = sadd.s32 %s46, 1
      %s48 = scalar_select %p45, %s46, %s47
      %p51 = pneg %p45
      %p52 = scmp.eq.s32.totalorder %s13, 1
      %p53 = por %p51, %p52
      %p54 = scmp.ne.s32.totalorder %s46, %s49
      %p55 = scmp.eq.s32.totalorder %s13, 0
      %p56 = por %p54, %p55
      %p57 = scmp.ne.s32.totalorder %s46, %s49
      %p58 = scmp.eq.s32.totalorder %s18, 1
      %p59 = por %p57, %p58
      %p60 = scmp.ne.s32.totalorder %s49, %s50
      %p61 = scmp.eq.s32.totalorder %s18, 0
      %p62 = por %p60, %p61
      %p63 = scmp.ne.s32.totalorder %s49, %s50
      %p64 = scmp.eq.s32.totalorder %s19, 1
      %p65 = por %p63, %p64
      %p67 = scmp.ne.s32.totalorder %s50, %s66
      %p68 = scmp.eq.s32.totalorder %s19, 0
      %p69 = por %p67, %p68
      %s70 = ssub.s32 %s22, %s31
      %s71 = ssub.s32 %s21, %s35
      %s72 = sor.u32 %s70, %s71
      %s73 = ssub.s32 %s20, %s39
      %s74 = sor.u32 %s72, %s73
      %p75 = scmp.eq.s32.totalorder %s74, 0
      %s77 = sadd.s32 %s76, 1
      %s78 = scalar_select %p75, %s76, %s77
      %p81 = pneg %p75
      %p82 = scmp.eq.s32.totalorder %s13, 1
      %p83 = por %p81, %p82
      %p84 = scmp.ne.s32.totalorder %s76, %s79
      %p85 = scmp.eq.s32.totalorder %s13, 0
      %p86 = por %p84, %p85
      %p87 = scmp.ne.s32.totalorder %s76, %s79
      %p88 = scmp.eq.s32.totalorder %s18, 1
      %p89 = por %p87, %p88
      %p90 = scmp.ne.s32.totalorder %s79, %s80
      %p91 = scmp.eq.s32.totalorder %s18, 0
      %p92 = por %p90, %p91
      %p93 = scmp.ne.s32.totalorder %s79, %s80
      %p94 = scmp.eq.s32.totalorder %s19, 1
      %p95 = por %p93, %p94
      %p97 = scmp.ne.s32.totalorder %s80, %s96
      %p98 = scmp.eq.s32.totalorder %s19, 0
      %p99 = por %p97, %p98
      %p100 = scmp.le.s32.totalorder 1, %s13
      %p101 = scmp.lt.s32.totalorder %s13, 3
      %p102 = pnand %p100, %p101
      %p103 = pneg %p102
      // Predicated region
      $region9: #{tpu_custom_call.1} parent=5 // pred_check
        _
      $region10: #{tpu_custom_call.1} parent=5 // pred_check_branch
        %105 = sbr.rel (%p102) target = $region12
      $region11: #{tpu_custom_call.1} parent=5 // pred_region
        %s106 = ssub.s32 %s13, 1
      $region12: #{tpu_custom_call.1} parent=5 // pred_fallthru
        _
      %p107 = scmp.lt.s32.totalorder %s13, 2
      // Predicated region
      $region13: #{tpu_custom_call.1} parent=5 // pred_check
        %p108 = pneg %p107
      $region14: #{tpu_custom_call.1} parent=5 // pred_check_branch
        %110 = sbr.rel (%p108) target = $region16
      $region15: #{tpu_custom_call.1} parent=5 // pred_region
        // Predicated region
        $region17: #{tpu_custom_call.1} parent=15 // pred_check
          %p111 = pneg %p56
        $region18: #{tpu_custom_call.1} parent=15 // pred_check_branch
          %113 = sbr.rel (%p111) target = $region20
        $region19: #{tpu_custom_call.1} parent=15 // pred_region
          %s114 = sand.u32 %s46, 1
          %s115 = scalar_lea.sflag [#allocation3], %s114
          %s116 = sand.u32 %s46, 1
          %s117 = smul.addr %s116, 256
          %s118 = scalar_lea.vmem [#allocation2], %s117
          %s119 = smul.u32 16, %s20
          %s120 = smul.u32 2, %s21
          %s122 = ssub.s32 4096, 4096
          %123 = vsyncadd %s115, %s122
          %s124 = smul.addr %s119, 2
          %s125 = sadd.s32 %s120, %s124
          %s126 = smul.addr %s22, 32
          %s127 = sadd.s32 %s125, %s126
          %s128 = smul.addr %s127, 128
          %s129 = scalar_lea.hbm %s0, %s128
          %s130 = sshll.u32 %s118, 4
          %s131 = int_to_ptr.vmem [resolvable:$true] %s130
          %136 = dma.hbm_to_vmem [thread:$0]  %s129, 4096, %s131, %s115, 256, 256, 16
        $region20: #{tpu_custom_call.1} parent=15 // pred_fallthru
          _
      $region16: #{tpu_custom_call.1} parent=5 // pred_fallthru
        _
      %p137 = scmp.le.s32.totalorder 1, %s13
      %p138 = scmp.lt.s32.totalorder %s13, 3
      %p139 = pnand %p137, %p138
      %p140 = pneg %p139
      // Predicated region
      $region21: #{tpu_custom_call.1} parent=5 // pred_check
        _
      $region22: #{tpu_custom_call.1} parent=5 // pred_check_branch
        %142 = sbr.rel (%p139) target = $region24
      $region23: #{tpu_custom_call.1} parent=5 // pred_region
        %s143 = ssub.s32 %s13, 1
        %s144 = sand.u32 %s49, 1
        %s145 = scalar_lea.sflag [#allocation3], %s144
        %s146 = sand.u32 %s49, 1
        %s147 = smul.addr %s146, 256
        %s148 = scalar_lea.vmem [#allocation2], %s147
        // Predicated region
        $region25: #{tpu_custom_call.1} parent=23 // pred_check
          %p149 = pneg %p62
        $region26: #{tpu_custom_call.1} parent=23 // pred_check_branch
          %151 = sbr.rel (%p149) target = $region28
        $region27: #{tpu_custom_call.1} parent=23 // pred_region
          %152 = dma.done %s145, 4096
        $region28: #{tpu_custom_call.1} parent=23 // pred_fallthru
          _
        %s153 = sand.u32 %s49, 1
        %s154 = scalar_lea.sflag [#allocation3], %s153
        %s155 = sand.u32 %s49, 1
        %s156 = smul.addr %s155, 256
        %s157 = scalar_lea.vmem [#allocation2], %s156
        %p158 = pneg %p62
        %p159 = pneg %p59
        %p160 = pneg %p92
        %p161 = pneg %p89
        %s162 = sand.u32 %s79, 1
        %s163 = scalar_lea.sflag [#allocation4], %s162
        %s164 = sand.u32 %s79, 1
        %s165 = smul.addr %s164, 256
        %s166 = scalar_lea.vmem [#allocation5], %s165
        %s167 = smul.u32 16, %s23
        %s168 = smul.u32 2, %s24
        %s169 = smul.u32 32, %s24
        %v170 = vld [vmem:[%s148] sm:$0xff]
        %v171 = vld [vmem:[%s148 + $0x8] sm:$0xff]
        %v172 = vld [vmem:[%s148 + $0x10] sm:$0xff]
        %v173 = vld [vmem:[%s148 + $0x18] sm:$0xff]
        %v174 = vld [vmem:[%s148 + $0x20] sm:$0xff]
        %v175 = vld [vmem:[%s148 + $0x28] sm:$0xff]
        %v176 = vld [vmem:[%s148 + $0x30] sm:$0xff]
        %v177 = vld [vmem:[%s148 + $0x38] sm:$0xff]
        %v178 = vld [vmem:[%s148 + $0x40] sm:$0xff]
        %v179 = vld [vmem:[%s148 + $0x48] sm:$0xff]
        %v180 = vld [vmem:[%s148 + $0x50] sm:$0xff]
        %v181 = vld [vmem:[%s148 + $0x58] sm:$0xff]
        %v182 = vld [vmem:[%s148 + $0x60] sm:$0xff]
        %v183 = vld [vmem:[%s148 + $0x68] sm:$0xff]
        %v184 = vld [vmem:[%s148 + $0x70] sm:$0xff]
        %v185 = vld [vmem:[%s148 + $0x78] sm:$0xff]
        %v186 = vld [vmem:[%s148 + $0x80] sm:$0xff]
        %v187 = vld [vmem:[%s148 + $0x88] sm:$0xff]
        %v188 = vld [vmem:[%s148 + $0x90] sm:$0xff]
        %v189 = vld [vmem:[%s148 + $0x98] sm:$0xff]
        %v190 = vld [vmem:[%s148 + $0xa0] sm:$0xff]
        %v191 = vld [vmem:[%s148 + $0xa8] sm:$0xff]
        %v192 = vld [vmem:[%s148 + $0xb0] sm:$0xff]
        %v193 = vld [vmem:[%s148 + $0xb8] sm:$0xff]
        %v194 = vld [vmem:[%s148 + $0xc0] sm:$0xff]
        %v195 = vld [vmem:[%s148 + $0xc8] sm:$0xff]
        %v196 = vld [vmem:[%s148 + $0xd0] sm:$0xff]
        %v197 = vld [vmem:[%s148 + $0xd8] sm:$0xff]
        %v198 = vld [vmem:[%s148 + $0xe0] sm:$0xff]
        %v199 = vld [vmem:[%s148 + $0xe8] sm:$0xff]
        %v200 = vld [vmem:[%s148 + $0xf0] sm:$0xff]
        %v201 = vld [vmem:[%s148 + $0xf8] sm:$0xff]
        %202 = vxpose.xlu0.b32.start [1/16] %v170, 128
        %203 = vxpose.xlu0.b32.cont [2/16] %v172, 128
        %204 = vxpose.xlu0.b32.cont [3/16] %v174, 128
        %205 = vxpose.xlu0.b32.cont [4/16] %v176, 128
        %206 = vxpose.xlu0.b32.cont [5/16] %v178, 128
        %207 = vxpose.xlu0.b32.cont [6/16] %v180, 128
        %208 = vxpose.xlu0.b32.cont [7/16] %v182, 128
        %209 = vxpose.xlu0.b32.cont [8/16] %v184, 128
        %210 = vxpose.xlu0.b32.cont [9/16] %v186, 128
        %211 = vxpose.xlu0.b32.cont [10/16] %v188, 128
        %212 = vxpose.xlu0.b32.cont [11/16] %v190, 128
        %213 = vxpose.xlu0.b32.cont [12/16] %v192, 128
        %214 = vxpose.xlu0.b32.cont [13/16] %v194, 128
        %215 = vxpose.xlu0.b32.cont [14/16] %v196, 128
        %216 = vxpose.xlu0.b32.cont [15/16] %v198, 128
        %217 = vxpose.xlu0.b32.end [16/16] %v200, 128
        %v218 = vpop.trf.xlu0
        %v219 = vpop.trf.xlu0
        %v220 = vpop.trf.xlu0
        %v221 = vpop.trf.xlu0
        %v222 = vpop.trf.xlu0
        %v223 = vpop.trf.xlu0
        %v224 = vpop.trf.xlu0
        %v225 = vpop.trf.xlu0
        %v226 = vpop.trf.xlu0
        %v227 = vpop.trf.xlu0
        %v228 = vpop.trf.xlu0
        %v229 = vpop.trf.xlu0
        %v230 = vpop.trf.xlu0
        %v231 = vpop.trf.xlu0
        %v232 = vpop.trf.xlu0
        %v233 = vpop.trf.xlu0
        %234 = vxpose.xlu0.b32.start [1/16] %v171, 128
        %235 = vxpose.xlu0.b32.cont [2/16] %v173, 128
        %236 = vxpose.xlu0.b32.cont [3/16] %v175, 128
        %237 = vxpose.xlu0.b32.cont [4/16] %v177, 128
        %238 = vxpose.xlu0.b32.cont [5/16] %v179, 128
        %239 = vxpose.xlu0.b32.cont [6/16] %v181, 128
        %240 = vxpose.xlu0.b32.cont [7/16] %v183, 128
        %241 = vxpose.xlu0.b32.cont [8/16] %v185, 128
        %242 = vxpose.xlu0.b32.cont [9/16] %v187, 128
        %243 = vxpose.xlu0.b32.cont [10/16] %v189, 128
        %244 = vxpose.xlu0.b32.cont [11/16] %v191, 128
        %245 = vxpose.xlu0.b32.cont [12/16] %v193, 128
        %246 = vxpose.xlu0.b32.cont [13/16] %v195, 128
        %247 = vxpose.xlu0.b32.cont [14/16] %v197, 128
        %248 = vxpose.xlu0.b32.cont [15/16] %v199, 128
        %249 = vxpose.xlu0.b32.end [16/16] %v201, 128
        %v250 = vpop.trf.xlu0
        %v251 = vpop.trf.xlu0
        %v252 = vpop.trf.xlu0
        %v253 = vpop.trf.xlu0
        %v254 = vpop.trf.xlu0
        %v255 = vpop.trf.xlu0
        %v256 = vpop.trf.xlu0
        %v257 = vpop.trf.xlu0
        %v258 = vpop.trf.xlu0
        %v259 = vpop.trf.xlu0
        %v260 = vpop.trf.xlu0
        %v261 = vpop.trf.xlu0
        %v262 = vpop.trf.xlu0
        %v263 = vpop.trf.xlu0
        %v264 = vpop.trf.xlu0
        %v265 = vpop.trf.xlu0
        %266 = vst [vmem:[%s166] sm:$0xff] %v218
        %267 = vst [vmem:[%s166 + $0x8] sm:$0xff] %v219
        %268 = vst [vmem:[%s166 + $0x10] sm:$0xff] %v220
        %269 = vst [vmem:[%s166 + $0x18] sm:$0xff] %v221
        %270 = vst [vmem:[%s166 + $0x20] sm:$0xff] %v222
        %271 = vst [vmem:[%s166 + $0x28] sm:$0xff] %v223
        %272 = vst [vmem:[%s166 + $0x30] sm:$0xff] %v224
        %273 = vst [vmem:[%s166 + $0x38] sm:$0xff] %v225
        %274 = vst [vmem:[%s166 + $0x40] sm:$0xff] %v226
        %275 = vst [vmem:[%s166 + $0x48] sm:$0xff] %v227
        %276 = vst [vmem:[%s166 + $0x50] sm:$0xff] %v228
        %277 = vst [vmem:[%s166 + $0x58] sm:$0xff] %v229
        %278 = vst [vmem:[%s166 + $0x60] sm:$0xff] %v230
        %279 = vst [vmem:[%s166 + $0x68] sm:$0xff] %v231
        %280 = vst [vmem:[%s166 + $0x70] sm:$0xff] %v232
        %281 = vst [vmem:[%s166 + $0x78] sm:$0xff] %v233
        %282 = vst [vmem:[%s166 + $0x80] sm:$0xff] %v250
        %283 = vst [vmem:[%s166 + $0x88] sm:$0xff] %v251
        %284 = vst [vmem:[%s166 + $0x90] sm:$0xff] %v252
        %285 = vst [vmem:[%s166 + $0x98] sm:$0xff] %v253
        %286 = vst [vmem:[%s166 + $0xa0] sm:$0xff] %v254
        %287 = vst [vmem:[%s166 + $0xa8] sm:$0xff] %v255
        %288 = vst [vmem:[%s166 + $0xb0] sm:$0xff] %v256
        %289 = vst [vmem:[%s166 + $0xb8] sm:$0xff] %v257
        %290 = vst [vmem:[%s166 + $0xc0] sm:$0xff] %v258
        %291 = vst [vmem:[%s166 + $0xc8] sm:$0xff] %v259
        %292 = vst [vmem:[%s166 + $0xd0] sm:$0xff] %v260
        %293 = vst [vmem:[%s166 + $0xd8] sm:$0xff] %v261
        %294 = vst [vmem:[%s166 + $0xe0] sm:$0xff] %v262
        %295 = vst [vmem:[%s166 + $0xe8] sm:$0xff] %v263
        %296 = vst [vmem:[%s166 + $0xf0] sm:$0xff] %v264
        %297 = vst [vmem:[%s166 + $0xf8] sm:$0xff] %v265
        %s298 = sand.u32 %s79, 1
        %s299 = scalar_lea.sflag [#allocation4], %s298
        %s300 = sand.u32 %s79, 1
        %s301 = smul.addr %s300, 256
        %s302 = scalar_lea.vmem [#allocation5], %s301
        // Predicated region
        $region29: #{tpu_custom_call.1} parent=23 // pred_check
          %p303 = pneg %p89
        $region30: #{tpu_custom_call.1} parent=23 // pred_check_branch
          %305 = sbr.rel (%p303) target = $region32
        $region31: #{tpu_custom_call.1} parent=23 // pred_region
          %s306 = smul.u32 32, %s24
          %s308 = ssub.s32 4096, 4096
          %309 = vsyncadd %s299, %s308
          %s310 = sadd.s32 %s23, %s306
          %s311 = smul.addr %s25, 32
          %s312 = sadd.s32 %s310, %s311
          %s313 = smul.addr %s312, 128
          %s314 = scalar_lea.hbm %s1, %s313
          %s315 = sshll.u32 %s302, 4
          %s316 = int_to_ptr.vmem [resolvable:$true] %s315
          %321 = dma.vmem_to_hbm [thread:$0]  %s316, 4096, %s314, %s299, 128, 128, 8
        $region32: #{tpu_custom_call.1} parent=23 // pred_fallthru
          _
      $region24: #{tpu_custom_call.1} parent=5 // pred_fallthru
        _
      %p322 = scmp.le.s32.totalorder 2, %s13
      // Predicated region
      $region33: #{tpu_custom_call.1} parent=5 // pred_check
        %p323 = pneg %p322
      $region34: #{tpu_custom_call.1} parent=5 // pred_check_branch
        %325 = sbr.rel (%p323) target = $region36
      $region35: #{tpu_custom_call.1} parent=5 // pred_region
        %s326 = ssub.s32 %s13, 2
        // Predicated region
        $region37: #{tpu_custom_call.1} parent=35 // pred_check
          %p327 = pneg %p95
        $region38: #{tpu_custom_call.1} parent=35 // pred_check_branch
          %329 = sbr.rel (%p327) target = $region40
        $region39: #{tpu_custom_call.1} parent=35 // pred_region
          %s330 = sand.u32 %s80, 1
          %s331 = scalar_lea.sflag [#allocation4], %s330
          %s332 = sand.u32 %s80, 1
          %s333 = smul.addr %s332, 256
          %s334 = scalar_lea.vmem [#allocation5], %s333
          %335 = dma.done %s331, 4096
        $region40: #{tpu_custom_call.1} parent=35 // pred_fallthru
          _
      $region36: #{tpu_custom_call.1} parent=5 // pred_fallthru
        _
    $region6: #{tpu_custom_call.1} parent=1 // loop_footer
      %s17 = sadd.s32 1, %s13
    $region7: #{tpu_custom_call.1} parent=1 // loop_footer_branch
      %12 = sbr.rel target = $region3
    $region8: #{tpu_custom_call.1} parent=1 // loop_exit
      _
    %336 = vsyncpa [#allocation3], 1
    %s337 = scalar_lea.sflag [#allocation3], 1
    %338 = vsyncpa %s337, 1
    %339 = vsyncpa [#allocation4], 1
    %s340 = scalar_lea.sflag [#allocation4], 1
    %341 = vsyncpa %s340, 1

</llo_original>
